<compile_context>
chip_gen: v7x
topology: tpu7x:2x2x1
jax: 0.10.0
libtpu: 0.0.40
codegen_flags: <defaults>
</compile_context>

<pallas_src>
import jax
import jax.numpy as jnp
from jax.experimental import pallas as pl
from jax.experimental.pallas import tpu as pltpu


# ----------------------------- Pallas kernels ------------------------------

def encoder_gates_kernel(pooled_ref, fe_w_ref, fe_b_ref, enc_w_ref, enc_b_ref,
                         bns_ref, bnb_ref, wih_ref, b_ref, gx_ref):
    # pooled_ref: (tn, C) f32 — one tile of pooled frames (rows are t*B + b).
    pooled = pooled_ref[...]
    # Surrogate backbone: linear projection to "resnet feature" dim + ReLU.
    # (K=3 dot; left on the MXU — only worth moving to VPU FMAs if profiling shows
    #  the encoder matmul stream on the critical path.)
    feat = jnp.dot(pooled.astype(jnp.bfloat16), fe_w_ref[...],
                   preferred_element_type=jnp.float32) + fe_b_ref[...]
    feat = jnp.maximum(feat, 0.0)
    # Encoder.final: Linear(feat_dim, latent_dim) + BatchNorm1d (eval, folded).
    z = jnp.dot(feat.astype(jnp.bfloat16), enc_w_ref[...],
                preferred_element_type=jnp.float32) + enc_b_ref[...]
    z = z * bns_ref[...] + bnb_ref[...]
    # Hoisted LSTM input projection for BOTH directions as one (latent, 8H) dot
    # (bias = b_ih + b_hh folded). One lane-dense (tn, 8H) writeback stream.
    gx_ref[...] = (jnp.dot(z.astype(jnp.bfloat16), wih_ref[...],
                           preferred_element_type=jnp.float32)
                   + b_ref[...]).astype(gx_ref.dtype)


def make_lstm_head_kernel(T, B, hd, fuse_dirs):
    # Bounded unroll keeps code size / vreg live ranges in check for long sequences.
    unroll = True if T <= 16 else 8

    def kernel(gx_ref, whh_ref, watt_ref, batt_ref, w1_ref, b1_ref,
               bns_ref, bnb_ref, w2_ref, b2_ref, out_ref, x_sc):
        # gx_ref: (T, B, 8H) f32, time-major. [:, :, 0:4H] fwd x-gates, [4H:8H] bwd.
        # whh_ref: fused -> (2H, 8H) block-diag bf16; split -> (2, H, 4H) bf16.
        # x_sc:   (T, B, 2H) f32 VMEM scratch — LSTM outputs never touch HBM.

        def gate_math(gates, c):
            # PyTorch gate order i, f, g, o — slices at 128-lane boundaries.
            i = jax.nn.sigmoid(gates[:, 0 * hd:1 * hd])
            f = jax.nn.sigmoid(gates[:, 1 * hd:2 * hd])
            g = jnp.tanh(gates[:, 2 * hd:3 * hd])
            o = jax.nn.sigmoid(gates[:, 3 * hd:4 * hd])
            c_new = f * c + i * g
            h_new = o * jnp.tanh(c_new)
            return h_new, c_new

        def body(s, carry):
            h_f, c_f, h_b, c_b = carry
            tb = T - 1 - s
            gx_s = gx_ref[s]            # (B, 8H) — forward step uses [:4H]
            gx_t = gx_ref[tb]           # (B, 8H) — backward step uses [4H:]
            if fuse_dirs:
                # One (B, 2H) @ (2H, 8H) block-diagonal recurrent dot (v6e/v7x).
                hcat = jnp.concatenate([h_f, h_b], axis=-1).astype(jnp.bfloat16)
                rec = jnp.dot(hcat, whh_ref[...],
                              preferred_element_type=jnp.float32)     # (B, 8H)
                rec_f = rec[:, 0:4 * hd]
                rec_b = rec[:, 4 * hd:8 * hd]
            else:
                # v5e path: K=128 already fills the MXU; keep per-direction dots.
                rec_f = jnp.dot(h_f.astype(jnp.bfloat16), whh_ref[0],
                                preferred_element_type=jnp.float32)
                rec_b = jnp.dot(h_b.astype(jnp.bfloat16), whh_ref[1],
                                preferred_element_type=jnp.float32)
            h_f, c_f = gate_math(gx_s[:, 0:4 * hd] + rec_f, c_f)
            h_b, c_b = gate_math(gx_t[:, 4 * hd:8 * hd] + rec_b, c_b)
            # Per-step stores land only in VMEM scratch (sublane masking is moot).
            x_sc[pl.ds(s, 1), :, 0:hd] = h_f[None]
            x_sc[pl.ds(tb, 1), :, hd:2 * hd] = h_b[None]
            return h_f, c_f, h_b, c_b

        zeros = jnp.zeros((B, hd), jnp.float32)
        jax.lax.fori_loop(0, T, body, (zeros, zeros, zeros, zeros), unroll=unroll)

        # ---- fused head epilogue: attention over time + output layers ----
        xs = x_sc[...]                                                   # (T, B, 2H)
        # attention_layer: Linear(2H, 1) -> squeeze -> softmax over time.
        att_logits = jnp.sum(xs * watt_ref[...][None], axis=-1) + batt_ref[...]  # (T, B)
        att = jax.nn.softmax(att_logits, axis=0)
        ctx = jnp.sum(att[:, :, None] * xs, axis=0)                      # (B, 2H)
        # output_layers: Linear -> BN(eval, folded) -> ReLU -> Linear -> Softmax.
        h1 = jnp.dot(ctx.astype(jnp.bfloat16), w1_ref[...],
                     preferred_element_type=jnp.float32) + b1_ref[...]
        h1 = jnp.maximum(h1 * bns_ref[...] + bnb_ref[...], 0.0)
        logits = jnp.dot(h1.astype(jnp.bfloat16), w2_ref[...],
                         preferred_element_type=jnp.float32) + b2_ref[...]
        # Padded class columns carry a -1e30 bias -> exactly 0 probability (f32 path).
        out_ref[...] = jax.nn.softmax(logits, axis=-1).astype(out_ref.dtype)

    return kernel


# ------------------------------- wrappers -----------------------------------

def _vmem_spec():
    return pl.BlockSpec(memory_space=pltpu.MemorySpace.VMEM)


def _pick_tile(n):
    # Largest listed divisor that still leaves >= 2 grid steps so v7x can shard rows
    # across its 2 TensorCores; fall back to the largest divisor (or n) otherwise.
    cands = (512, 256, 128, 64, 32, 16, 8)
    divs = [t for t in cands if n % t == 0]
    if not divs:
        return n
    for t in divs:
        if n // t >= 2:
            return t
    return divs[-1]


def _use_fused_recurrent_dirs():
    # 256-wide MXU chips (v6e / v7x): fuse both directions into one block-diagonal
    # recurrent dot. 128-wide MXU chips (v5e and older): keep per-direction dots.
    # Both paths compute identical math; detection errors only affect performance.
    try:
        kind = jax.devices()[0].device_kind.lower()
    except Exception:
        return True
    return not any(v in kind for v in ("v2", "v3", "v4", "v5"))


def run_encoder_gates(pooled_tb, p):
    n, c = pooled_tb.shape
    feat_dim = p["fe_w"].shape[1]
    latent = p["enc_w"].shape[1]
    g8 = p["wih_cat"].shape[1]                     # 8 * hidden (both directions)
    tn = _pick_tile(n)

    def wspec(r, cc):                              # constant (whole-array) weight block
        return pl.BlockSpec((r, cc), lambda i: (0, 0))

    return pl.pallas_call(
        encoder_gates_kernel,
        out_shape=jax.ShapeDtypeStruct((n, g8), jnp.float32),
        grid=(n // tn,),
        in_specs=[
            pl.BlockSpec((tn, c), lambda i: (i, 0)),
            wspec(c, feat_dim), wspec(1, feat_dim),
            wspec(feat_dim, latent), wspec(1, latent),
            wspec(1, latent), wspec(1, latent),
            wspec(latent, g8), wspec(1, g8),
        ],
        out_specs=pl.BlockSpec((tn, g8), lambda i: (i, 0)),
        compiler_params=pltpu.CompilerParams(dimension_semantics=("parallel",)),
    )(pooled_tb, p["fe_w"], p["fe_b"], p["enc_w"], p["enc_b"],
      p["enc_bn_scale"], p["enc_bn_shift"], p["wih_cat"], p["b_cat"])


def run_lstm_head(gx, p, fuse_dirs):
    # Fused bidirectional LSTM + attention + output head in a single pallas_call.
    # NOTE (v7x): gx + weights + (T, B, 2H) scratch must stay under the ~32 MiB scoped
    # VMEM default; time-chunk gx (pltpu.emit_pipeline) if T*B grows far beyond this.
    T, B, _ = gx.shape
    hd = p["whh_stack"].shape[1]
    c_pad = p["out2_w"].shape[1]
    whh = p["whh_cat"] if fuse_dirs else p["whh_stack"]
    kernel = make_lstm_head_kernel(T, B, hd, fuse_dirs)
    return pl.pallas_call(
        kernel,
        out_shape=jax.ShapeDtypeStruct((B, c_pad), jnp.float32),
        in_specs=[_vmem_spec()] * 10,
        out_specs=_vmem_spec(),
        scratch_shapes=[pltpu.VMEM((T, B, 2 * hd), jnp.float32)],
    )(gx, whh, p["att_w"], p["att_b"], p["out1_w"], p["out1_b"],
      p["out_bn_scale"], p["out_bn_shift"], p["out2_w"], p["out2_b"])


def conv_lstm_forward(x, p, num_classes, fuse_dirs):
    B, T, C, H, W = x.shape
    # Global average pool in the wrapper: kernels never DMA full frames; the only
    # wrapper transpose is of the tiny pooled (B, T, C) tensor.
    pooled = jnp.mean(x.astype(jnp.float32), axis=(-2, -1))              # (B, T, C)
    pooled_tb = jnp.transpose(pooled, (1, 0, 2)).reshape(T * B, C)       # time-major
    gx = run_encoder_gates(pooled_tb, p)                                 # (T*B, 8H)
    gx = gx.reshape(T, B, gx.shape[-1])                                  # free reshape
    probs = run_lstm_head(gx, p, fuse_dirs)                              # (B, c_pad)
    return probs[:, :num_classes]


# --------------------------- pure-JAX f32 reference ---------------------------

def reference_forward(x, p, num_classes):
    # Same weights (bf16 upcast to f32), all-f32 activations, no Pallas.
    B, T, C, H, W = x.shape
    f32 = lambda a: a.astype(jnp.float32)
    hd = p["whh_stack"].shape[1]

    pooled = jnp.mean(x.astype(jnp.float32), axis=(-2, -1)).reshape(B * T, C)
    feat = jnp.maximum(pooled @ f32(p["fe_w"]) + p["fe_b"], 0.0)
    z = feat @ f32(p["enc_w"]) + p["enc_b"]
    z = (z * p["enc_bn_scale"] + p["enc_bn_shift"]).reshape(B, T, -1)

    wih = f32(p["wih_cat"])
    wih_f, wih_b = wih[:, :4 * hd], wih[:, 4 * hd:]
    b_f, b_b = p["b_cat"][:, :4 * hd], p["b_cat"][:, 4 * hd:]
    whh_f, whh_b = f32(p["whh_stack"][0]), f32(p["whh_stack"][1])

    def run_dir(zseq, wih_d, b_d, whh_d):
        def step(carry, zt):
            h, c = carry
            gates = zt @ wih_d + b_d + h @ whh_d
            i = jax.nn.sigmoid(gates[:, 0 * hd:1 * hd])
            f = jax.nn.sigmoid(gates[:, 1 * hd:2 * hd])
            g = jnp.tanh(gates[:, 2 * hd:3 * hd])
            o = jax.nn.sigmoid(gates[:, 3 * hd:4 * hd])
            c = f * c + i * g
            h = o * jnp.tanh(c)
            return (h, c), h
        init = (jnp.zeros((B, hd), jnp.float32), jnp.zeros((B, hd), jnp.float32))
        _, hs = jax.lax.scan(step, init, jnp.swapaxes(zseq, 0, 1))   # (T, B, hd)
        return hs

    h_f = run_dir(z, wih_f, b_f, whh_f)
    h_b = run_dir(z[:, ::-1], wih_b, b_b, whh_b)[::-1]
    xs = jnp.concatenate([h_f, h_b], axis=-1)                        # (T, B, 2H)

    att_logits = jnp.einsum("tbh,h->tb", xs, f32(p["att_w"])[0]) + p["att_b"][0, 0]
    att = jax.nn.softmax(att_logits, axis=0)
    ctx = jnp.einsum("tb,tbh->bh", att, xs)
    h1 = ctx @ f32(p["out1_w"]) + p["out1_b"]
    h1 = jnp.maximum(h1 * p["out_bn_scale"] + p["out_bn_shift"], 0.0)
    logits = h1 @ f32(p["out2_w"]) + p["out2_b"]
    return jax.nn.softmax(logits, axis=-1)[:, :num_classes]


# ---------------------------- parameter init ---------------------------------

def init_params(key, c, latent_dim, hidden_dim, num_classes, feat_dim):
    ks = iter(jax.random.split(key, 16))

    def linear(k, fan_in, fan_out):
        bound = 1.0 / jnp.sqrt(jnp.float32(fan_in))
        kw, kb = jax.random.split(k)
        w = jax.random.uniform(kw, (fan_in, fan_out), jnp.float32, -bound, bound)
        b = jax.random.uniform(kb, (1, fan_out), jnp.float32, -bound, bound)
        return w, b

    def bn_folded(k, n, eps=1e-5):
        k1, k2, k3, k4 = jax.random.split(k, 4)
        gamma = 1.0 + 0.1 * jax.random.normal(k1, (1, n), jnp.float32)
        beta = 0.1 * jax.random.normal(k2, (1, n), jnp.float32)
        mean = 0.1 * jax.random.normal(k3, (1, n), jnp.float32)
        var = 1.0 + 0.1 * jax.random.uniform(k4, (1, n), jnp.float32)
        scale = gamma / jnp.sqrt(var + eps)
        shift = beta - mean * scale
        return scale, shift

    def lstm_dir(k, input_dim, hdim):
        bound = 1.0 / jnp.sqrt(jnp.float32(hdim))
        k1, k2, k3, k4 = jax.random.split(k, 4)
        wih = jax.random.uniform(k1, (4 * hdim, input_dim), jnp.float32, -bound, bound)
        whh = jax.random.uniform(k2, (4 * hdim, hdim), jnp.float32, -bound, bound)
        bih = jax.random.uniform(k3, (4 * hdim,), jnp.float32, -bound, bound)
        bhh = jax.random.uniform(k4, (4 * hdim,), jnp.float32, -bound, bound)
        return wih.T, whh.T, (bih + bhh)[None, :]      # f32; cast at pack time

    p = {}
    fe_w, fe_b = linear(next(ks), c, feat_dim)                 # surrogate backbone
    p["fe_w"], p["fe_b"] = fe_w.astype(jnp.bfloat16), fe_b
    enc_w, enc_b = linear(next(ks), feat_dim, latent_dim)
    p["enc_w"], p["enc_b"] = enc_w.astype(jnp.bfloat16), enc_b
    p["enc_bn_scale"], p["enc_bn_shift"] = bn_folded(next(ks), latent_dim)

    wih_f, whh_f, b_f = lstm_dir(next(ks), latent_dim, hidden_dim)
    wih_b, whh_b, b_b = lstm_dir(next(ks), latent_dim, hidden_dim)
    # Fused input projection for both directions: one (latent, 8H) weight / bias.
    p["wih_cat"] = jnp.concatenate([wih_f, wih_b], axis=1).astype(jnp.bfloat16)
    p["b_cat"] = jnp.concatenate([b_f, b_b], axis=1)
    # Recurrent weights: split stack (v5e path) and block-diagonal fused (v6e/v7x).
    p["whh_stack"] = jnp.stack([whh_f, whh_b]).astype(jnp.bfloat16)        # (2, H, 4H)
    whh_cat = jnp.zeros((2 * hidden_dim, 8 * hidden_dim), jnp.float32)
    whh_cat = whh_cat.at[:hidden_dim, :4 * hidden_dim].set(whh_f)
    whh_cat = whh_cat.at[hidden_dim:, 4 * hidden_dim:].set(whh_b)
    p["whh_cat"] = whh_cat.astype(jnp.bfloat16)                            # (2H, 8H)

    f2 = 2 * hidden_dim                                        # bidirectional
    att_w, att_b = linear(next(ks), f2, 1)
    p["att_w"] = att_w.T                                       # (1, 2H) row vector
    p["att_b"] = att_b                                         # (1, 1)
    w1, b1 = linear(next(ks), f2, hidden_dim)
    p["out1_w"], p["out1_b"] = w1.astype(jnp.bfloat16), b1
    p["out_bn_scale"], p["out_bn_shift"] = bn_folded(next(ks), hidden_dim)
    w2, b2 = linear(next(ks), hidden_dim, num_classes)
    c_pad = max(128, ((num_classes + 127) // 128) * 128)       # lane-dense classifier
    w2p = jnp.zeros((hidden_dim, c_pad), jnp.float32).at[:, :num_classes].set(w2)
    b2p = jnp.full((1, c_pad), -1e30, jnp.float32).at[:, :num_classes].set(b2)
    p["out2_w"], p["out2_b"] = w2p.astype(jnp.bfloat16), b2p
    return p


# --------------------------------- main --------------------------------------

if __name__ == "__main__":
    batch, seq, c, h, w = 2, 8, 3, 16, 16
    # 128-multiples keep gate slices / stores lane-dense.
    latent_dim, hidden_dim, num_classes, feat_dim = 128, 128, 8, 256

    key = jax.random.PRNGKey(0)
    k_x, k_p = jax.random.split(key)
    x = jax.random.normal(k_x, (batch, seq, c, h, w), jnp.float32)
    params = init_params(k_p, c, latent_dim, hidden_dim, num_classes, feat_dim)

    fuse_dirs = _use_fused_recurrent_dirs()
    out = conv_lstm_forward(x, params, num_classes, fuse_dirs)
    out = jax.block_until_ready(out)

    assert out.shape == (batch, num_classes)
    assert bool(jnp.all(jnp.isfinite(out)))
    # output rows are softmax distributions (padded classes carry exactly 0 mass)
    assert bool(jnp.allclose(jnp.sum(out, axis=-1), 1.0, atol=1e-4))
    # validate against an all-f32 pure-JAX reference (bf16 activation-cast impact)
    ref = jax.block_until_ready(reference_forward(x, params, num_classes))
    assert bool(jnp.allclose(out, ref, atol=5e-2)), "kernel deviates from f32 reference"
    print("KERNEL_OK")
</pallas_src>

<mosaic_0001>
module attributes {stable_mosaic.version = 11 : i64} {
  func.func @encoder_gates_kernel(%arg0: i32, %arg1: memref<8x3xf32, #tpu.memory_space<vmem>>, %arg2: memref<3x256xbf16, #tpu.memory_space<vmem>>, %arg3: memref<1x256xf32, #tpu.memory_space<vmem>>, %arg4: memref<256x128xbf16, #tpu.memory_space<vmem>>, %arg5: memref<1x128xf32, #tpu.memory_space<vmem>>, %arg6: memref<1x128xf32, #tpu.memory_space<vmem>>, %arg7: memref<1x128xf32, #tpu.memory_space<vmem>>, %arg8: memref<128x1024xbf16, #tpu.memory_space<vmem>>, %arg9: memref<1x1024xf32, #tpu.memory_space<vmem>>, %arg10: memref<8x1024xf32, #tpu.memory_space<vmem>>) attributes {dimension_semantics = [#tpu.dimension_semantics<parallel>], iteration_bounds = array<i64: 2>, scalar_prefetch = 0 : i64, scratch_operands = 0 : i64, tpu.core_type = #tpu.core_type<tc>, window_params = [{transform_indices = @transform_0, window_bounds = array<i64: 8, 3>}, {pipeline_mode = #tpu.pipeline_mode<synchronous>, transform_indices = @transform_1, window_bounds = array<i64: 3, 256>}, {pipeline_mode = #tpu.pipeline_mode<synchronous>, transform_indices = @transform_2, window_bounds = array<i64: 1, 256>}, {pipeline_mode = #tpu.pipeline_mode<synchronous>, transform_indices = @transform_3, window_bounds = array<i64: 256, 128>}, {pipeline_mode = #tpu.pipeline_mode<synchronous>, transform_indices = @transform_4, window_bounds = array<i64: 1, 128>}, {pipeline_mode = #tpu.pipeline_mode<synchronous>, transform_indices = @transform_5, window_bounds = array<i64: 1, 128>}, {pipeline_mode = #tpu.pipeline_mode<synchronous>, transform_indices = @transform_6, window_bounds = array<i64: 1, 128>}, {pipeline_mode = #tpu.pipeline_mode<synchronous>, transform_indices = @transform_7, window_bounds = array<i64: 128, 1024>}, {pipeline_mode = #tpu.pipeline_mode<synchronous>, transform_indices = @transform_8, window_bounds = array<i64: 1, 1024>}, {transform_indices = @transform_9, window_bounds = array<i64: 8, 1024>}]} {
    %c0 = arith.constant 0 : index
    %c0_0 = arith.constant 0 : index
    %0 = vector.load %arg1[%c0, %c0_0] : memref<8x3xf32, #tpu.memory_space<vmem>>, vector<8x3xf32>
    %1 = arith.truncf %0 : vector<8x3xf32> to vector<8x3xbf16>
    %c0_1 = arith.constant 0 : index
    %c0_2 = arith.constant 0 : index
    %2 = vector.load %arg2[%c0_1, %c0_2] : memref<3x256xbf16, #tpu.memory_space<vmem>>, vector<3x256xbf16>
    %cst = arith.constant dense<0.000000e+00> : vector<8x256xf32>
    %3 = tpu.matmul %1, %2, %cst {dimension_numbers = #tpu.dot_dimension_numbers<[1], [0], [0], [1], [0, 0, 1, 1], [], []>} : vector<8x3xbf16>, vector<3x256xbf16>, vector<8x256xf32> -> vector<8x256xf32>
    %c0_3 = arith.constant 0 : index
    %c0_4 = arith.constant 0 : index
    %4 = vector.load %arg3[%c0_3, %c0_4] : memref<1x256xf32, #tpu.memory_space<vmem>>, vector<1x256xf32>
    %5 = vector.broadcast %4 : vector<1x256xf32> to vector<8x256xf32>
    %6 = arith.addf %3, %5 : vector<8x256xf32>
    %cst_5 = arith.constant 0.000000e+00 : f32
    %7 = vector.broadcast %cst_5 : f32 to vector<8x256xf32>
    %8 = arith.maximumf %6, %7 : vector<8x256xf32>
    %9 = arith.truncf %8 : vector<8x256xf32> to vector<8x256xbf16>
    %c0_6 = arith.constant 0 : index
    %c0_7 = arith.constant 0 : index
    %10 = vector.load %arg4[%c0_6, %c0_7] : memref<256x128xbf16, #tpu.memory_space<vmem>>, vector<256x128xbf16>
    %cst_8 = arith.constant dense<0.000000e+00> : vector<8x128xf32>
    %11 = tpu.matmul %9, %10, %cst_8 {dimension_numbers = #tpu.dot_dimension_numbers<[1], [0], [0], [1], [0, 0, 1, 1], [], []>} : vector<8x256xbf16>, vector<256x128xbf16>, vector<8x128xf32> -> vector<8x128xf32>
    %c0_9 = arith.constant 0 : index
    %c0_10 = arith.constant 0 : index
    %12 = vector.load %arg5[%c0_9, %c0_10] : memref<1x128xf32, #tpu.memory_space<vmem>>, vector<1x128xf32>
    %13 = vector.broadcast %12 : vector<1x128xf32> to vector<8x128xf32>
    %14 = arith.addf %11, %13 : vector<8x128xf32>
    %c0_11 = arith.constant 0 : index
    %c0_12 = arith.constant 0 : index
    %15 = vector.load %arg6[%c0_11, %c0_12] : memref<1x128xf32, #tpu.memory_space<vmem>>, vector<1x128xf32>
    %16 = vector.broadcast %15 : vector<1x128xf32> to vector<8x128xf32>
    %17 = arith.mulf %14, %16 : vector<8x128xf32>
    %c0_13 = arith.constant 0 : index
    %c0_14 = arith.constant 0 : index
    %18 = vector.load %arg7[%c0_13, %c0_14] : memref<1x128xf32, #tpu.memory_space<vmem>>, vector<1x128xf32>
    %19 = vector.broadcast %18 : vector<1x128xf32> to vector<8x128xf32>
    %20 = arith.addf %17, %19 : vector<8x128xf32>
    %21 = arith.truncf %20 : vector<8x128xf32> to vector<8x128xbf16>
    %c0_15 = arith.constant 0 : index
    %c0_16 = arith.constant 0 : index
    %22 = vector.load %arg8[%c0_15, %c0_16] : memref<128x1024xbf16, #tpu.memory_space<vmem>>, vector<128x1024xbf16>
    %cst_17 = arith.constant dense<0.000000e+00> : vector<8x1024xf32>
    %23 = tpu.matmul %21, %22, %cst_17 {dimension_numbers = #tpu.dot_dimension_numbers<[1], [0], [0], [1], [0, 0, 1, 1], [], []>} : vector<8x128xbf16>, vector<128x1024xbf16>, vector<8x1024xf32> -> vector<8x1024xf32>
    %c0_18 = arith.constant 0 : index
    %c0_19 = arith.constant 0 : index
    %24 = vector.load %arg9[%c0_18, %c0_19] : memref<1x1024xf32, #tpu.memory_space<vmem>>, vector<1x1024xf32>
    %25 = vector.broadcast %24 : vector<1x1024xf32> to vector<8x1024xf32>
    %26 = arith.addf %23, %25 : vector<8x1024xf32>
    %c0_20 = arith.constant 0 : index
    %c0_21 = arith.constant 0 : index
    %27 = vector.load %arg10[%c0_20, %c0_21] : memref<8x1024xf32, #tpu.memory_space<vmem>>, vector<8x1024xf32>
    tpu.vector_store %arg10[%c0_20, %c0_21], %26 {strides = array<i32>} : memref<8x1024xf32, #tpu.memory_space<vmem>>, vector<8x1024xf32>,
    return
  }
  func.func @transform_0(%arg0: i32) -> (i32, i32) {
    %c0_i32 = arith.constant 0 : i32
    %c0_i32_0 = arith.constant 0 : i32
    return %arg0, %c0_i32 : i32, i32
  }
  func.func @transform_1(%arg0: i32) -> (i32, i32) {
    %c0_i32 = arith.constant 0 : i32
    %c0_i32_0 = arith.constant 0 : i32
    %c0_i32_1 = arith.constant 0 : i32
    return %c0_i32, %c0_i32_0 : i32, i32
  }
  func.func @transform_2(%arg0: i32) -> (i32, i32) {
    %c0_i32 = arith.constant 0 : i32
    %c0_i32_0 = arith.constant 0 : i32
    %c0_i32_1 = arith.constant 0 : i32
    return %c0_i32, %c0_i32_0 : i32, i32
  }
  func.func @transform_3(%arg0: i32) -> (i32, i32) {
    %c0_i32 = arith.constant 0 : i32
    %c0_i32_0 = arith.constant 0 : i32
    %c0_i32_1 = arith.constant 0 : i32
    return %c0_i32, %c0_i32_0 : i32, i32
  }
  func.func @transform_4(%arg0: i32) -> (i32, i32) {
    %c0_i32 = arith.constant 0 : i32
    %c0_i32_0 = arith.constant 0 : i32
    %c0_i32_1 = arith.constant 0 : i32
    return %c0_i32, %c0_i32_0 : i32, i32
  }
  func.func @transform_5(%arg0: i32) -> (i32, i32) {
    %c0_i32 = arith.constant 0 : i32
    %c0_i32_0 = arith.constant 0 : i32
    %c0_i32_1 = arith.constant 0 : i32
    return %c0_i32, %c0_i32_0 : i32, i32
  }
  func.func @transform_6(%arg0: i32) -> (i32, i32) {
    %c0_i32 = arith.constant 0 : i32
    %c0_i32_0 = arith.constant 0 : i32
    %c0_i32_1 = arith.constant 0 : i32
    return %c0_i32, %c0_i32_0 : i32, i32
  }
  func.func @transform_7(%arg0: i32) -> (i32, i32) {
    %c0_i32 = arith.constant 0 : i32
    %c0_i32_0 = arith.constant 0 : i32
    %c0_i32_1 = arith.constant 0 : i32
    return %c0_i32, %c0_i32_0 : i32, i32
  }
  func.func @transform_8(%arg0: i32) -> (i32, i32) {
    %c0_i32 = arith.constant 0 : i32
    %c0_i32_0 = arith.constant 0 : i32
    %c0_i32_1 = arith.constant 0 : i32
    return %c0_i32, %c0_i32_0 : i32, i32
  }
  func.func @transform_9(%arg0: i32) -> (i32, i32) {
    %c0_i32 = arith.constant 0 : i32
    %c0_i32_0 = arith.constant 0 : i32
    return %arg0, %c0_i32 : i32, i32
  }
}

</mosaic_0001>

<llo_original>
// kernel: tpu_custom_call.1
$region0: #{tpu_custom_call.1}
  #allocation0 [shape = 'u32[]', space=smem, size = 0x4, offset = 0x4, fixed_abs, tag = 'smem constant byte address 0x4 - core index']
  #allocation1 [shape = 'u32[144,128]{1,0:T(1,128)}', space=vmem, size = 0x12000, scoped, tag = 'internal scratch']
  %s0 = inlined_call_operand.vmem [shape: f32[16,3], index: 0, kind: input, shape index: {}]
  %s1 = inlined_call_operand.vmem [shape: bf16[3,256], index: 1, kind: input, shape index: {}]
  %s2 = inlined_call_operand.vmem [shape: f32[1,256], index: 2, kind: input, shape index: {}]
  %s3 = inlined_call_operand.hbm [shape: bf16[256,128], index: 3, kind: input, shape index: {}]
  %s4 = inlined_call_operand.vmem [shape: f32[1,128], index: 4, kind: input, shape index: {}]
  %s5 = inlined_call_operand.vmem [shape: f32[1,128], index: 5, kind: input, shape index: {}]
  %s6 = inlined_call_operand.vmem [shape: f32[1,128], index: 6, kind: input, shape index: {}]
  %s7 = inlined_call_operand.hbm [shape: bf16[128,1024], index: 7, kind: input, shape index: {}]
  %s8 = inlined_call_operand.vmem [shape: f32[1,1024], index: 8, kind: input, shape index: {}]
  %s9 = inlined_call_operand.hbm [shape: f32[16,1024], index: 9, kind: output, shape index: {}]
  %s10 = sld [smem:[#allocation0]]
  $region77: #{tpu_custom_call.1} parent=0
    _
  %s12 = ssub.s32 1, %s10
  %s13 = scalar_select 0, %s12, %s10
  $region1: #{tpu_custom_call.1} parent=0
    #allocation2 [shape = 'u8[65536]{0}', space=vmem, size = 0x10000, scoped, tag = 'input window, operand 3, single buffered']
    #allocation3 [shape = 's32[2]{0}', space=sflag, size = 0x8, scoped, tag = 'scoped memory for tpu_custom_call.1']
    #allocation4 [shape = 's32[2]{0}', space=sflag, size = 0x8, scoped, tag = 'scoped memory for tpu_custom_call.1']
    #allocation5 [shape = 'u8[262144]{0}', space=vmem, size = 0x40000, scoped, tag = 'input window, operand 7, single buffered']
    #allocation6 [shape = 's32[1]{0}', space=sflag, size = 0x4, scoped, tag = 'scoped memory for tpu_custom_call.1']
    #allocation7 [shape = 'u8[65536]{0}', space=vmem, size = 0x10000, scoped, tag = 'output window, operand 0']
    %14 = vsyncpa [#allocation3], 0
    %15 = vsyncpa [#allocation6], 0
    %16 = vsyncpa [#allocation4], 0
    %s17 = scalar_lea.sflag [#allocation4], 1
    %18 = vsyncpa %s17, 0
    loop: start=0, step=1, limit=4
    $region2: #{tpu_custom_call.1} parent=1 // loop_pre_header
      _
    $region3: #{tpu_custom_call.1} parent=1 // loop_header
      %s20 = sphi 0, %s24
      %p21 = scmp.ge.s32.totalorder %s20, 4
      %s30 = sphi 0, %s32
      %s33 = sphi 0, %s30
      %s34 = sphi 0, %s33
      %s50 = sphi 0, %s34
      %s54 = sphi 0, %s54
      %s56 = sphi 0, %s54
      %s57 = sphi 0, %s56
      %s71 = sphi 0, %s57
      %s75 = sphi 0, %s75
      %s77 = sphi 0, %s75
      %s78 = sphi 0, %s77
      %s92 = sphi 0, %s78
      %s96 = sphi 0, %s96
      %s98 = sphi 0, %s96
      %s99 = sphi 0, %s98
      %s113 = sphi 0, %s99
      %s117 = sphi 0, %s117
      %s119 = sphi 0, %s117
      %s120 = sphi 0, %s119
      %s134 = sphi 0, %s120
      %s138 = sphi 0, %s138
      %s140 = sphi 0, %s138
      %s141 = sphi 0, %s140
      %s155 = sphi 0, %s141
      %s159 = sphi 0, %s159
      %s161 = sphi 0, %s159
      %s162 = sphi 0, %s161
      %s176 = sphi 0, %s162
      %s180 = sphi 0, %s180
      %s182 = sphi 0, %s180
      %s183 = sphi 0, %s182
      %s197 = sphi 0, %s183
      %s201 = sphi 0, %s201
      %s203 = sphi 0, %s201
      %s204 = sphi 0, %s203
      %s218 = sphi 0, %s204
      %s224 = sphi 0, %s226
      %s227 = sphi 0, %s224
      %s228 = sphi 0, %s227
      %s244 = sphi 0, %s228
    $region4: #{tpu_custom_call.1} parent=1 // loop_header_branch
      %23 = sbr.rel (%p21) target = $region8
    $region5: #{tpu_custom_call.1} parent=1 // loop_body
      %s25 = ssub.s32 %s20, 1
      %s26 = ssub.s32 %s20, 2
      %s27 = sadd.s32 %s20, 1
      %s28 = ssub.s32 %s20, %s27
      %p29 = scmp.eq.s32.totalorder %s28, 0
      %s31 = sadd.s32 %s30, 1
      %s32 = scalar_select %p29, %s30, %s31
      %p35 = pneg %p29
      %p36 = scmp.eq.s32.totalorder %s20, 1
      %p37 = por %p35, %p36
      %p38 = scmp.ne.s32.totalorder %s30, %s33
      %p39 = scmp.eq.s32.totalorder %s20, 0
      %p40 = por %p38, %p39
      %p41 = scmp.ne.s32.totalorder %s30, %s33
      %p42 = scmp.eq.s32.totalorder %s25, 1
      %p43 = por %p41, %p42
      %p44 = scmp.ne.s32.totalorder %s33, %s34
      %p45 = scmp.eq.s32.totalorder %s25, 0
      %p46 = por %p44, %p45
      %p47 = scmp.ne.s32.totalorder %s33, %s34
      %p48 = scmp.eq.s32.totalorder %s26, 1
      %p49 = por %p47, %p48
      %p51 = scmp.ne.s32.totalorder %s34, %s50
      %p52 = scmp.eq.s32.totalorder %s26, 0
      %p53 = por %p51, %p52
      %s55 = sadd.s32 %s54, 1
      %p58 = scmp.eq.s32.totalorder %s20, 1
      %p59 = scmp.ne.s32.totalorder %s54, %s56
      %p60 = scmp.eq.s32.totalorder %s20, 0
      %p61 = por %p59, %p60
      %p62 = scmp.ne.s32.totalorder %s54, %s56
      %p63 = scmp.eq.s32.totalorder %s25, 1
      %p64 = por %p62, %p63
      %p65 = scmp.ne.s32.totalorder %s56, %s57
      %p66 = scmp.eq.s32.totalorder %s25, 0
      %p67 = por %p65, %p66
      %p68 = scmp.ne.s32.totalorder %s56, %s57
      %p69 = scmp.eq.s32.totalorder %s26, 1
      %p70 = por %p68, %p69
      %p72 = scmp.ne.s32.totalorder %s57, %s71
      %p73 = scmp.eq.s32.totalorder %s26, 0
      %p74 = por %p72, %p73
      %s76 = sadd.s32 %s75, 1
      %p79 = scmp.eq.s32.totalorder %s20, 1
      %p80 = scmp.ne.s32.totalorder %s75, %s77
      %p81 = scmp.eq.s32.totalorder %s20, 0
      %p82 = por %p80, %p81
      %p83 = scmp.ne.s32.totalorder %s75, %s77
      %p84 = scmp.eq.s32.totalorder %s25, 1
      %p85 = por %p83, %p84
      %p86 = scmp.ne.s32.totalorder %s77, %s78
      %p87 = scmp.eq.s32.totalorder %s25, 0
      %p88 = por %p86, %p87
      %p89 = scmp.ne.s32.totalorder %s77, %s78
      %p90 = scmp.eq.s32.totalorder %s26, 1
      %p91 = por %p89, %p90
      %p93 = scmp.ne.s32.totalorder %s78, %s92
      %p94 = scmp.eq.s32.totalorder %s26, 0
      %p95 = por %p93, %p94
      %s97 = sadd.s32 %s96, 1
      %p100 = scmp.eq.s32.totalorder %s20, 1
      %p101 = scmp.ne.s32.totalorder %s96, %s98
      %p102 = scmp.eq.s32.totalorder %s20, 0
      %p103 = por %p101, %p102
      %p104 = scmp.ne.s32.totalorder %s96, %s98
      %p105 = scmp.eq.s32.totalorder %s25, 1
      %p106 = por %p104, %p105
      %p107 = scmp.ne.s32.totalorder %s98, %s99
      %p108 = scmp.eq.s32.totalorder %s25, 0
      %p109 = por %p107, %p108
      %p110 = scmp.ne.s32.totalorder %s98, %s99
      %p111 = scmp.eq.s32.totalorder %s26, 1
      %p112 = por %p110, %p111
      %p114 = scmp.ne.s32.totalorder %s99, %s113
      %p115 = scmp.eq.s32.totalorder %s26, 0
      %p116 = por %p114, %p115
      %s118 = sadd.s32 %s117, 1
      %p121 = scmp.eq.s32.totalorder %s20, 1
      %p122 = scmp.ne.s32.totalorder %s117, %s119
      %p123 = scmp.eq.s32.totalorder %s20, 0
      %p124 = por %p122, %p123
      %p125 = scmp.ne.s32.totalorder %s117, %s119
      %p126 = scmp.eq.s32.totalorder %s25, 1
      %p127 = por %p125, %p126
      %p128 = scmp.ne.s32.totalorder %s119, %s120
      %p129 = scmp.eq.s32.totalorder %s25, 0
      %p130 = por %p128, %p129
      %p131 = scmp.ne.s32.totalorder %s119, %s120
      %p132 = scmp.eq.s32.totalorder %s26, 1
      %p133 = por %p131, %p132
      %p135 = scmp.ne.s32.totalorder %s120, %s134
      %p136 = scmp.eq.s32.totalorder %s26, 0
      %p137 = por %p135, %p136
      %s139 = sadd.s32 %s138, 1
      %p142 = scmp.eq.s32.totalorder %s20, 1
      %p143 = scmp.ne.s32.totalorder %s138, %s140
      %p144 = scmp.eq.s32.totalorder %s20, 0
      %p145 = por %p143, %p144
      %p146 = scmp.ne.s32.totalorder %s138, %s140
      %p147 = scmp.eq.s32.totalorder %s25, 1
      %p148 = por %p146, %p147
      %p149 = scmp.ne.s32.totalorder %s140, %s141
      %p150 = scmp.eq.s32.totalorder %s25, 0
      %p151 = por %p149, %p150
      %p152 = scmp.ne.s32.totalorder %s140, %s141
      %p153 = scmp.eq.s32.totalorder %s26, 1
      %p154 = por %p152, %p153
      %p156 = scmp.ne.s32.totalorder %s141, %s155
      %p157 = scmp.eq.s32.totalorder %s26, 0
      %p158 = por %p156, %p157
      %s160 = sadd.s32 %s159, 1
      %p163 = scmp.eq.s32.totalorder %s20, 1
      %p164 = scmp.ne.s32.totalorder %s159, %s161
      %p165 = scmp.eq.s32.totalorder %s20, 0
      %p166 = por %p164, %p165
      %p167 = scmp.ne.s32.totalorder %s159, %s161
      %p168 = scmp.eq.s32.totalorder %s25, 1
      %p169 = por %p167, %p168
      %p170 = scmp.ne.s32.totalorder %s161, %s162
      %p171 = scmp.eq.s32.totalorder %s25, 0
      %p172 = por %p170, %p171
      %p173 = scmp.ne.s32.totalorder %s161, %s162
      %p174 = scmp.eq.s32.totalorder %s26, 1
      %p175 = por %p173, %p174
      %p177 = scmp.ne.s32.totalorder %s162, %s176
      %p178 = scmp.eq.s32.totalorder %s26, 0
      %p179 = por %p177, %p178
      %s181 = sadd.s32 %s180, 1
      %p184 = scmp.eq.s32.totalorder %s20, 1
      %p185 = scmp.ne.s32.totalorder %s180, %s182
      %p186 = scmp.eq.s32.totalorder %s20, 0
      %p187 = por %p185, %p186
      %p188 = scmp.ne.s32.totalorder %s180, %s182
      %p189 = scmp.eq.s32.totalorder %s25, 1
      %p190 = por %p188, %p189
      %p191 = scmp.ne.s32.totalorder %s182, %s183
      %p192 = scmp.eq.s32.totalorder %s25, 0
      %p193 = por %p191, %p192
      %p194 = scmp.ne.s32.totalorder %s182, %s183
      %p195 = scmp.eq.s32.totalorder %s26, 1
      %p196 = por %p194, %p195
      %p198 = scmp.ne.s32.totalorder %s183, %s197
      %p199 = scmp.eq.s32.totalorder %s26, 0
      %p200 = por %p198, %p199
      %s202 = sadd.s32 %s201, 1
      %p205 = scmp.eq.s32.totalorder %s20, 1
      %p206 = scmp.ne.s32.totalorder %s201, %s203
      %p207 = scmp.eq.s32.totalorder %s20, 0
      %p208 = por %p206, %p207
      %p209 = scmp.ne.s32.totalorder %s201, %s203
      %p210 = scmp.eq.s32.totalorder %s25, 1
      %p211 = por %p209, %p210
      %p212 = scmp.ne.s32.totalorder %s203, %s204
      %p213 = scmp.eq.s32.totalorder %s25, 0
      %p214 = por %p212, %p213
      %p215 = scmp.ne.s32.totalorder %s203, %s204
      %p216 = scmp.eq.s32.totalorder %s26, 1
      %p217 = por %p215, %p216
      %p219 = scmp.ne.s32.totalorder %s204, %s218
      %p220 = scmp.eq.s32.totalorder %s26, 0
      %p221 = por %p219, %p220
      %s222 = ssub.s32 %s20, %s27
      %p223 = scmp.eq.s32.totalorder %s222, 0
      %s225 = sadd.s32 %s224, 1
      %s226 = scalar_select %p223, %s224, %s225
      %p229 = pneg %p223
      %p230 = scmp.eq.s32.totalorder %s20, 1
      %p231 = por %p229, %p230
      %p232 = scmp.ne.s32.totalorder %s224, %s227
      %p233 = scmp.eq.s32.totalorder %s20, 0
      %p234 = por %p232, %p233
      %p235 = scmp.ne.s32.totalorder %s224, %s227
      %p236 = scmp.eq.s32.totalorder %s25, 1
      %p237 = por %p235, %p236
      %p238 = scmp.ne.s32.totalorder %s227, %s228
      %p239 = scmp.eq.s32.totalorder %s25, 0
      %p240 = por %p238, %p239
      %p241 = scmp.ne.s32.totalorder %s227, %s228
      %p242 = scmp.eq.s32.totalorder %s26, 1
      %p243 = por %p241, %p242
      %p245 = scmp.ne.s32.totalorder %s228, %s244
      %p246 = scmp.eq.s32.totalorder %s26, 0
      %p247 = por %p245, %p246
      %p248 = scmp.le.s32.totalorder 1, %s20
      %p249 = scmp.lt.s32.totalorder %s20, 3
      %p250 = pnand %p248, %p249
      %p251 = pneg %p250
      // Predicated region
      $region9: #{tpu_custom_call.1} parent=5 // pred_check
        _
      $region10: #{tpu_custom_call.1} parent=5 // pred_check_branch
        %253 = sbr.rel (%p250) target = $region12
      $region11: #{tpu_custom_call.1} parent=5 // pred_region
        %s254 = ssub.s32 %s20, 1
        // Predicated region
        $region13: #{tpu_custom_call.1} parent=11 // pred_check
          %p255 = pneg %p67
        $region14: #{tpu_custom_call.1} parent=11 // pred_check_branch
          %257 = sbr.rel (%p255) target = $region16
        $region15: #{tpu_custom_call.1} parent=11 // pred_region
          _
        $region16: #{tpu_custom_call.1} parent=11 // pred_fallthru
          _
        // Predicated region
        $region17: #{tpu_custom_call.1} parent=11 // pred_check
          %p258 = pneg %p88
        $region18: #{tpu_custom_call.1} parent=11 // pred_check_branch
          %260 = sbr.rel (%p258) target = $region20
        $region19: #{tpu_custom_call.1} parent=11 // pred_region
          _
        $region20: #{tpu_custom_call.1} parent=11 // pred_fallthru
          _
        // Predicated region
        $region21: #{tpu_custom_call.1} parent=11 // pred_check
          %p261 = pneg %p109
        $region22: #{tpu_custom_call.1} parent=11 // pred_check_branch
          %263 = sbr.rel (%p261) target = $region24
        $region23: #{tpu_custom_call.1} parent=11 // pred_region
          %s265 = ssub.s32 2048, 2048
          %266 = vsyncadd [#allocation3], %s265
          %s267 = sshll.u32 [#allocation2], 4
          %s268 = int_to_ptr.vmem [resolvable:$true] %s267
          %273 = dma.hbm_to_vmem [thread:$0]  %s3, 2048, %s268, [#allocation3], 64, 64, 4
        $region24: #{tpu_custom_call.1} parent=11 // pred_fallthru
          _
        // Predicated region
        $region25: #{tpu_custom_call.1} parent=11 // pred_check
          %p274 = pneg %p130
        $region26: #{tpu_custom_call.1} parent=11 // pred_check_branch
          %276 = sbr.rel (%p274) target = $region28
        $region27: #{tpu_custom_call.1} parent=11 // pred_region
          _
        $region28: #{tpu_custom_call.1} parent=11 // pred_fallthru
          _
        // Predicated region
        $region29: #{tpu_custom_call.1} parent=11 // pred_check
          %p277 = pneg %p151
        $region30: #{tpu_custom_call.1} parent=11 // pred_check_branch
          %279 = sbr.rel (%p277) target = $region32
        $region31: #{tpu_custom_call.1} parent=11 // pred_region
          _
        $region32: #{tpu_custom_call.1} parent=11 // pred_fallthru
          _
        // Predicated region
        $region33: #{tpu_custom_call.1} parent=11 // pred_check
          %p280 = pneg %p172
        $region34: #{tpu_custom_call.1} parent=11 // pred_check_branch
          %282 = sbr.rel (%p280) target = $region36
        $region35: #{tpu_custom_call.1} parent=11 // pred_region
          _
        $region36: #{tpu_custom_call.1} parent=11 // pred_fallthru
          _
        // Predicated region
        $region37: #{tpu_custom_call.1} parent=11 // pred_check
          %p283 = pneg %p193
        $region38: #{tpu_custom_call.1} parent=11 // pred_check_branch
          %285 = sbr.rel (%p283) target = $region40
        $region39: #{tpu_custom_call.1} parent=11 // pred_region
          %s287 = ssub.s32 8192, 8192
          %288 = vsyncadd [#allocation6], %s287
          %s289 = sshll.u32 [#allocation5], 4
          %s290 = int_to_ptr.vmem [resolvable:$true] %s289
          %295 = dma.hbm_to_vmem [thread:$0]  %s7, 8192, %s290, [#allocation6], 512, 512, 32
        $region40: #{tpu_custom_call.1} parent=11 // pred_fallthru
          _
        // Predicated region
        $region41: #{tpu_custom_call.1} parent=11 // pred_check
          %p296 = pneg %p214
        $region42: #{tpu_custom_call.1} parent=11 // pred_check_branch
          %298 = sbr.rel (%p296) target = $region44
        $region43: #{tpu_custom_call.1} parent=11 // pred_region
          _
        $region44: #{tpu_custom_call.1} parent=11 // pred_fallthru
          _
      $region12: #{tpu_custom_call.1} parent=5 // pred_fallthru
        _
      %p299 = scmp.lt.s32.totalorder %s20, 2
      // Predicated region
      $region45: #{tpu_custom_call.1} parent=5 // pred_check
        %p300 = pneg %p299
      $region46: #{tpu_custom_call.1} parent=5 // pred_check_branch
        %302 = sbr.rel (%p300) target = $region48
      $region47: #{tpu_custom_call.1} parent=5 // pred_region
        // Predicated region
        $region49: #{tpu_custom_call.1} parent=47 // pred_check
          %p303 = pneg %p40
        $region50: #{tpu_custom_call.1} parent=47 // pred_check_branch
          %305 = sbr.rel (%p303) target = $region52
        $region51: #{tpu_custom_call.1} parent=47 // pred_region
          %p306 = scmp.lt.s32.totalorder %s20, 1
          %s307 = scalar_select %p306, %s20, 1
          %s308 = smul.addr %s307, 8
          %s309 = scalar_lea.vmem %s0, %s308
        $region52: #{tpu_custom_call.1} parent=47 // pred_fallthru
          _
      $region48: #{tpu_custom_call.1} parent=5 // pred_fallthru
        _
      %p310 = scmp.le.s32.totalorder 1, %s20
      %p311 = scmp.lt.s32.totalorder %s20, 3
      %p312 = pnand %p310, %p311
      %p313 = pneg %p312
      // Predicated region
      $region53: #{tpu_custom_call.1} parent=5 // pred_check
        _
      $region54: #{tpu_custom_call.1} parent=5 // pred_check_branch
        %315 = sbr.rel (%p312) target = $region56
      $region55: #{tpu_custom_call.1} parent=5 // pred_region
        %s316 = ssub.s32 %s20, 1
        // Predicated region
        $region57: #{tpu_custom_call.1} parent=55 // pred_check
          %p317 = pneg %p109
        $region58: #{tpu_custom_call.1} parent=55 // pred_check_branch
          %319 = sbr.rel (%p317) target = $region60
        $region59: #{tpu_custom_call.1} parent=55 // pred_region
          %320 = dma.done [#allocation3], 2048
        $region60: #{tpu_custom_call.1} parent=55 // pred_fallthru
          _
        // Predicated region
        $region61: #{tpu_custom_call.1} parent=55 // pred_check
          %p321 = pneg %p193
        $region62: #{tpu_custom_call.1} parent=55 // pred_check_branch
          %323 = sbr.rel (%p321) target = $region64
        $region63: #{tpu_custom_call.1} parent=55 // pred_region
          %324 = dma.done [#allocation6], 8192
        $region64: #{tpu_custom_call.1} parent=55 // pred_fallthru
          _
        %p325 = scmp.lt.s32.totalorder %s25, 1
        %s326 = scalar_select %p325, %s25, 1
        %s327 = smul.addr %s326, 8
        %s328 = scalar_lea.vmem %s0, %s327
        %p329 = pneg %p46
        %p330 = pneg %p43
        %p331 = pneg %p67
        %p332 = pneg %p64
        %p333 = pneg %p88
        %p334 = pneg %p85
        %p335 = pneg %p109
        %p336 = pneg %p106
        %p337 = pneg %p130
        %p338 = pneg %p127
        %p339 = pneg %p151
        %p340 = pneg %p148
        %p341 = pneg %p172
        %p342 = pneg %p169
        %p343 = pneg %p193
        %p344 = pneg %p190
        %p345 = pneg %p214
        %p346 = pneg %p211
        %p347 = pneg %p240
        %p348 = pneg %p237
        %s349 = sand.u32 %s227, 1
        %s350 = scalar_lea.sflag [#allocation4], %s349
        %s351 = sand.u32 %s227, 1
        %s352 = smul.addr %s351, 64
        %s353 = scalar_lea.vmem [#allocation7], %s352
        %p354 = scmp.lt.s32.totalorder %s25, 1
        %s355 = scalar_select %p354, %s25, 1
        %s356 = smul.addr %s355, 8
        %s357 = scalar_lea.vmem %s0, %s356
        %v359 = vld [vmem:[%s357] sm:$0xff]
        %v360 = vpack.c.bf16 %v359, %v359
        %v361 = vld [vmem:[%s1] sm:$0xf]
        %v362 = vld [vmem:[%s2] sm:$0x3]
        %v364 = vlaneseq
        %v365 = vshrl.u32 %v364, 7
        %v366 = vsub.s32 0, %v365
        %v367 = vrot.slane %v362, %v366
        %v368 = vlaneseq
        %v369 = vshrl.u32 %v368, 7
        %v370 = vsub.s32 1, %v369
        %v371 = vrot.slane %v362, %v370
        %v376 = vunpack.c.l.s4 1983009808
        %v377 = vunpack.c.0.s8 %v376
        %v378 = vlaneseq
        %v379 = vshrl.u32 %v378, 7
        %v380 = vsub.s32 %v377, %v379
        %v381 = vrot.slane %v361, %v380
        %v382 = vcombine.high %v381, %v381
        %vm383 = vcmask 23552
        %v385 = vsel %vm383, %v360, 0
        %vm387 = vcmask 1040384
        %vm388 = vcmask 1041408
        %v389 = vsel %vm387, 4294967295, 65535
        %v390 = vsel %vm388, %v389, 0
        %v392 = vand.u32 %v381, %v390
        %v395 = vand.u32 %v382, %v390
        %397 = vmatprep.subr.bf16.mxu0 %v395
        %398 = vmatpush1.bf16.msra.mxu0 %v392
        %399 = vmatprep.subr.bf16.mxu0 0
        %400 = vmatpush1.bf16.msra.mxu0 0
        %401 = vmatprep.subr.bf16.mxu0 0
        %402 = vmatpush1.bf16.msra.mxu0 0
        %403 = vmatprep.subr.bf16.mxu0 0
        %404 = vmatpush1.bf16.msra.mxu0 0
        %405 = vmatprep.subr.bf16.mxu0 0
        %406 = vmatpush1.bf16.msra.mxu0 0
        %407 = vmatprep.subr.bf16.mxu0 0
        %408 = vmatpush1.bf16.msra.mxu0 0
        %409 = vmatprep.subr.bf16.mxu0 0
        %410 = vmatpush1.bf16.msra.mxu0 0
        %411 = vmatprep.subr.bf16.mxu0 0
        %412 = vmatpush1.bf16.msra.mxu0 0
        %413 = vmatprep.subr.bf16.mxu0 0
        %414 = vmatpush1.bf16.msra.mxu0 0
        %415 = vmatprep.subr.bf16.mxu0 0
        %416 = vmatpush1.bf16.msra.mxu0 0
        %417 = vmatprep.subr.bf16.mxu0 0
        %418 = vmatpush1.bf16.msra.mxu0 0
        %419 = vmatprep.subr.bf16.mxu0 0
        %420 = vmatpush1.bf16.msra.mxu0 0
        %421 = vmatprep.subr.bf16.mxu0 0
        %422 = vmatpush1.bf16.msra.mxu0 0
        %423 = vmatprep.subr.bf16.mxu0 0
        %424 = vmatpush1.bf16.msra.mxu0 0
        %425 = vmatprep.subr.bf16.mxu0 0
        %426 = vmatpush1.bf16.msra.mxu0 0
        %427 = vmatprep.subr.bf16.mxu0 0
        %428 = vmatpush1.bf16.msra.mxu0 0
        %429 = vmatprep.mubr.bf16.mxu0 0
        %430 = vmatmul.mubr.bf16.gmra.mrb[0].mxu0 %v385
        %v431 = vpop.f32.mrb[0].mxu0
        %v432 = vadd.f32 %v367, %v431
        %v433 = vpop.f32.mrb[0].mxu0
        %v434 = vadd.f32 %v371, %v433
        %v435 = vpop.f32.mrb[0].mxu0
        %v436 = vpop.f32.mrb[0].mxu0
        %437 = vdwg.mxu0
        %v438 = vmax.f32 %v432, 0.0
        %v439 = vmax.f32 %v434, 0.0
        %v440 = vpack.c.bf16 %v438, %v438
        %v441 = vpack.c.bf16 %v439, %v439
        %v442 = vld [vmem:[#allocation2] sm:$0xf]
        %v443 = vld [vmem:[#allocation2 + $0x4] sm:$0xf]
        %v444 = vld [vmem:[#allocation2 + $0x8] sm:$0xf]
        %v445 = vld [vmem:[#allocation2 + $0xc] sm:$0xf]
        %v446 = vld [vmem:[#allocation2 + $0x10] sm:$0xf]
        %v447 = vld [vmem:[#allocation2 + $0x14] sm:$0xf]
        %v448 = vld [vmem:[#allocation2 + $0x18] sm:$0xf]
        %v449 = vld [vmem:[#allocation2 + $0x1c] sm:$0xf]
        %v450 = vld [vmem:[#allocation2 + $0x20] sm:$0xf]
        %v451 = vld [vmem:[#allocation2 + $0x24] sm:$0xf]
        %v452 = vld [vmem:[#allocation2 + $0x28] sm:$0xf]
        %v453 = vld [vmem:[#allocation2 + $0x2c] sm:$0xf]
        %v454 = vld [vmem:[#allocation2 + $0x30] sm:$0xf]
        %v455 = vld [vmem:[#allocation2 + $0x34] sm:$0xf]
        %v456 = vld [vmem:[#allocation2 + $0x38] sm:$0xf]
        %v457 = vld [vmem:[#allocation2 + $0x3c] sm:$0xf]
        %v458 = vld [vmem:[#allocation2 + $0x40] sm:$0xf]
        %v459 = vld [vmem:[#allocation2 + $0x44] sm:$0xf]
        %v460 = vld [vmem:[#allocation2 + $0x48] sm:$0xf]
        %v461 = vld [vmem:[#allocation2 + $0x4c] sm:$0xf]
        %v462 = vld [vmem:[#allocation2 + $0x50] sm:$0xf]
        %v463 = vld [vmem:[#allocation2 + $0x54] sm:$0xf]
        %v464 = vld [vmem:[#allocation2 + $0x58] sm:$0xf]
        %v465 = vld [vmem:[#allocation2 + $0x5c] sm:$0xf]
        %v466 = vld [vmem:[#allocation2 + $0x60] sm:$0xf]
        %v467 = vld [vmem:[#allocation2 + $0x64] sm:$0xf]
        %v468 = vld [vmem:[#allocation2 + $0x68] sm:$0xf]
        %v469 = vld [vmem:[#allocation2 + $0x6c] sm:$0xf]
        %v470 = vld [vmem:[#allocation2 + $0x70] sm:$0xf]
        %v471 = vld [vmem:[#allocation2 + $0x74] sm:$0xf]
        %v472 = vld [vmem:[#allocation2 + $0x78] sm:$0xf]
        %v473 = vld [vmem:[#allocation2 + $0x7c] sm:$0xf]
        %v474 = vld [vmem:[%s4] sm:$0x1]
        %v476 = vlaneseq
        %v477 = vshrl.u32 %v476, 7
        %v478 = vsub.s32 0, %v477
        %v479 = vrot.slane %v474, %v478
        %v513 = vunpack.c.l.b16 %v442
        %v514 = vunpack.c.l.b16 %v443
        %v515 = vunpack.c.l.b16 %v444
        %v516 = vunpack.c.l.b16 %v445
        %v517 = vunpack.c.l.b16 %v446
        %v518 = vunpack.c.l.b16 %v447
        %v519 = vunpack.c.l.b16 %v448
        %v520 = vunpack.c.l.b16 %v449
        %v521 = vunpack.c.l.b16 %v450
        %v522 = vunpack.c.l.b16 %v451
        %v523 = vunpack.c.l.b16 %v452
        %v524 = vunpack.c.l.b16 %v453
        %v525 = vunpack.c.l.b16 %v454
        %v526 = vunpack.c.l.b16 %v455
        %v527 = vunpack.c.l.b16 %v456
        %v528 = vunpack.c.l.b16 %v457
        %v529 = vunpack.c.l.b16 %v458
        %v530 = vunpack.c.l.b16 %v459
        %v531 = vunpack.c.l.b16 %v460
        %v532 = vunpack.c.l.b16 %v461
        %v533 = vunpack.c.l.b16 %v462
        %v534 = vunpack.c.l.b16 %v463
        %v535 = vunpack.c.l.b16 %v464
        %v536 = vunpack.c.l.b16 %v465
        %v537 = vunpack.c.l.b16 %v466
        %v538 = vunpack.c.l.b16 %v467
        %v539 = vunpack.c.l.b16 %v468
        %v540 = vunpack.c.l.b16 %v469
        %v541 = vunpack.c.l.b16 %v470
        %v542 = vunpack.c.l.b16 %v471
        %v543 = vunpack.c.l.b16 %v472
        %v544 = vunpack.c.l.b16 %v473
        %v545 = vpack.c.b16 %v514, %v513
        %v546 = vpack.c.b16 %v516, %v515
        %v547 = vpack.c.b16 %v518, %v517
        %v548 = vpack.c.b16 %v520, %v519
        %v549 = vpack.c.b16 %v522, %v521
        %v550 = vpack.c.b16 %v524, %v523
        %v551 = vpack.c.b16 %v526, %v525
        %v552 = vpack.c.b16 %v528, %v527
        %v553 = vpack.c.b16 %v530, %v529
        %v554 = vpack.c.b16 %v532, %v531
        %v555 = vpack.c.b16 %v534, %v533
        %v556 = vpack.c.b16 %v536, %v535
        %v557 = vpack.c.b16 %v538, %v537
        %v558 = vpack.c.b16 %v540, %v539
        %v559 = vpack.c.b16 %v542, %v541
        %v560 = vpack.c.b16 %v544, %v543
        %577 = vmatprep.subr.bf16.mxu0 0
        %578 = vmatpush1.bf16.msra.mxu0 %v545
        %579 = vmatprep.subr.bf16.mxu0 0
        %580 = vmatpush1.bf16.msra.mxu0 %v546
        %581 = vmatprep.subr.bf16.mxu0 0
        %582 = vmatpush1.bf16.msra.mxu0 %v547
        %583 = vmatprep.subr.bf16.mxu0 0
        %584 = vmatpush1.bf16.msra.mxu0 %v548
        %585 = vmatprep.subr.bf16.mxu0 0
        %586 = vmatpush1.bf16.msra.mxu0 %v549
        %587 = vmatprep.subr.bf16.mxu0 0
        %588 = vmatpush1.bf16.msra.mxu0 %v550
        %589 = vmatprep.subr.bf16.mxu0 0
        %590 = vmatpush1.bf16.msra.mxu0 %v551
        %591 = vmatprep.subr.bf16.mxu0 0
        %592 = vmatpush1.bf16.msra.mxu0 %v552
        %593 = vmatprep.subr.bf16.mxu0 0
        %594 = vmatpush1.bf16.msra.mxu0 %v553
        %595 = vmatprep.subr.bf16.mxu0 0
        %596 = vmatpush1.bf16.msra.mxu0 %v554
        %597 = vmatprep.subr.bf16.mxu0 0
        %598 = vmatpush1.bf16.msra.mxu0 %v555
        %599 = vmatprep.subr.bf16.mxu0 0
        %600 = vmatpush1.bf16.msra.mxu0 %v556
        %601 = vmatprep.subr.bf16.mxu0 0
        %602 = vmatpush1.bf16.msra.mxu0 %v557
        %603 = vmatprep.subr.bf16.mxu0 0
        %604 = vmatpush1.bf16.msra.mxu0 %v558
        %605 = vmatprep.subr.bf16.mxu0 0
        %606 = vmatpush1.bf16.msra.mxu0 %v559
        %607 = vmatprep.subr.bf16.mxu0 0
        %608 = vmatpush1.bf16.msra.mxu0 %v560
        %609 = vmatprep.mubr.bf16.mxu0 %v441
        %610 = vmatmul.mubr.bf16.gmra.mrb[0].mxu0 %v440
        %v611 = vpop.f32.mrb[0].mxu0
        %v612 = vadd.f32 %v479, %v611
        %v613 = vpop.f32.mrb[0].mxu0
        %v614 = vpop.f32.mrb[0].mxu0
        %v615 = vpop.f32.mrb[0].mxu0
        %616 = vdwg.mxu0
        %v617 = vld [vmem:[%s5] sm:$0x1]
        %v619 = vlaneseq
        %v620 = vshrl.u32 %v619, 7
        %v621 = vsub.s32 0, %v620
        %v622 = vrot.slane %v617, %v621
        %v624 = vmul.f32 %v612, %v622
        %v625 = vld [vmem:[%s6] sm:$0x1]
        %v627 = vlaneseq
        %v628 = vshrl.u32 %v627, 7
        %v629 = vsub.s32 0, %v628
        %v630 = vrot.slane %v625, %v629
        %v632 = vadd.f32 %v624, %v630
        %v633 = vpack.c.bf16 %v632, %v632
        %v634 = vld [vmem:[#allocation5] sm:$0xff]
        %v635 = vld [vmem:[#allocation5 + $0x8] sm:$0xff]
        %v636 = vld [vmem:[#allocation5 + $0x10] sm:$0xff]
        %v637 = vld [vmem:[#allocation5 + $0x18] sm:$0xff]
        %v638 = vld [vmem:[#allocation5 + $0x20] sm:$0xff]
        %v639 = vld [vmem:[#allocation5 + $0x28] sm:$0xff]
        %v640 = vld [vmem:[#allocation5 + $0x30] sm:$0xff]
        %v641 = vld [vmem:[#allocation5 + $0x38] sm:$0xff]
        %v642 = vld [vmem:[#allocation5 + $0x40] sm:$0xff]
        %v643 = vld [vmem:[#allocation5 + $0x48] sm:$0xff]
        %v644 = vld [vmem:[#allocation5 + $0x50] sm:$0xff]
        %v645 = vld [vmem:[#allocation5 + $0x58] sm:$0xff]
        %v646 = vld [vmem:[#allocation5 + $0x60] sm:$0xff]
        %v647 = vld [vmem:[#allocation5 + $0x68] sm:$0xff]
        %v648 = vld [vmem:[#allocation5 + $0x70] sm:$0xff]
        %v649 = vld [vmem:[#allocation5 + $0x78] sm:$0xff]
        %v650 = vld [vmem:[#allocation5 + $0x80] sm:$0xff]
        %v651 = vld [vmem:[#allocation5 + $0x88] sm:$0xff]
        %v652 = vld [vmem:[#allocation5 + $0x90] sm:$0xff]
        %v653 = vld [vmem:[#allocation5 + $0x98] sm:$0xff]
        %v654 = vld [vmem:[#allocation5 + $0xa0] sm:$0xff]
        %v655 = vld [vmem:[#allocation5 + $0xa8] sm:$0xff]
        %v656 = vld [vmem:[#allocation5 + $0xb0] sm:$0xff]
        %v657 = vld [vmem:[#allocation5 + $0xb8] sm:$0xff]
        %v658 = vld [vmem:[#allocation5 + $0xc0] sm:$0xff]
        %v659 = vld [vmem:[#allocation5 + $0xc8] sm:$0xff]
        %v660 = vld [vmem:[#allocation5 + $0xd0] sm:$0xff]
        %v661 = vld [vmem:[#allocation5 + $0xd8] sm:$0xff]
        %v662 = vld [vmem:[#allocation5 + $0xe0] sm:$0xff]
        %v663 = vld [vmem:[#allocation5 + $0xe8] sm:$0xff]
        %v664 = vld [vmem:[#allocation5 + $0xf0] sm:$0xff]
        %v665 = vld [vmem:[#allocation5 + $0xf8] sm:$0xff]
        %v666 = vld [vmem:[#allocation5 + $0x100] sm:$0xff]
        %v667 = vld [vmem:[#allocation5 + $0x108] sm:$0xff]
        %v668 = vld [vmem:[#allocation5 + $0x110] sm:$0xff]
        %v669 = vld [vmem:[#allocation5 + $0x118] sm:$0xff]
        %v670 = vld [vmem:[#allocation5 + $0x120] sm:$0xff]
        %v671 = vld [vmem:[#allocation5 + $0x128] sm:$0xff]
        %v672 = vld [vmem:[#allocation5 + $0x130] sm:$0xff]
        %v673 = vld [vmem:[#allocation5 + $0x138] sm:$0xff]
        %v674 = vld [vmem:[#allocation5 + $0x140] sm:$0xff]
        %v675 = vld [vmem:[#allocation5 + $0x148] sm:$0xff]
        %v676 = vld [vmem:[#allocation5 + $0x150] sm:$0xff]
        %v677 = vld [vmem:[#allocation5 + $0x158] sm:$0xff]
        %v678 = vld [vmem:[#allocation5 + $0x160] sm:$0xff]
        %v679 = vld [vmem:[#allocation5 + $0x168] sm:$0xff]
        %v680 = vld [vmem:[#allocation5 + $0x170] sm:$0xff]
        %v681 = vld [vmem:[#allocation5 + $0x178] sm:$0xff]
        %v682 = vld [vmem:[#allocation5 + $0x180] sm:$0xff]
        %v683 = vld [vmem:[#allocation5 + $0x188] sm:$0xff]
        %v684 = vld [vmem:[#allocation5 + $0x190] sm:$0xff]
        %v685 = vld [vmem:[#allocation5 + $0x198] sm:$0xff]
        %v686 = vld [vmem:[#allocation5 + $0x1a0] sm:$0xff]
        %v687 = vld [vmem:[#allocation5 + $0x1a8] sm:$0xff]
        %v688 = vld [vmem:[#allocation5 + $0x1b0] sm:$0xff]
        %v689 = vld [vmem:[#allocation5 + $0x1b8] sm:$0xff]
        %v690 = vld [vmem:[#allocation5 + $0x1c0] sm:$0xff]
        %v691 = vld [vmem:[#allocation5 + $0x1c8] sm:$0xff]
        %v692 = vld [vmem:[#allocation5 + $0x1d0] sm:$0xff]
        %v693 = vld [vmem:[#allocation5 + $0x1d8] sm:$0xff]
        %v694 = vld [vmem:[#allocation5 + $0x1e0] sm:$0xff]
        %v695 = vld [vmem:[#allocation5 + $0x1e8] sm:$0xff]
        %v696 = vld [vmem:[#allocation5 + $0x1f0] sm:$0xff]
        %v697 = vld [vmem:[#allocation5 + $0x1f8] sm:$0xff]
        %v698 = vld [vmem:[%s8] sm:$0xff]
        %v700 = vlaneseq
        %v701 = vshrl.u32 %v700, 7
        %v702 = vsub.s32 0, %v701
        %v703 = vrot.slane %v698, %v702
        %v704 = vlaneseq
        %v705 = vshrl.u32 %v704, 7
        %v706 = vsub.s32 1, %v705
        %v707 = vrot.slane %v698, %v706
        %v708 = vlaneseq
        %v709 = vshrl.u32 %v708, 7
        %v710 = vsub.s32 2, %v709
        %v711 = vrot.slane %v698, %v710
        %v712 = vlaneseq
        %v713 = vshrl.u32 %v712, 7
        %v714 = vsub.s32 3, %v713
        %v715 = vrot.slane %v698, %v714
        %v716 = vlaneseq
        %v717 = vshrl.u32 %v716, 7
        %v718 = vsub.s32 4, %v717
        %v719 = vrot.slane %v698, %v718
        %v720 = vlaneseq
        %v721 = vshrl.u32 %v720, 7
        %v722 = vsub.s32 5, %v721
        %v723 = vrot.slane %v698, %v722
        %v724 = vlaneseq
        %v725 = vshrl.u32 %v724, 7
        %v726 = vsub.s32 6, %v725
        %v727 = vrot.slane %v698, %v726
        %v728 = vlaneseq
        %v729 = vshrl.u32 %v728, 7
        %v730 = vsub.s32 7, %v729
        %v731 = vrot.slane %v698, %v730
        %v804 = vunpack.c.l.b16 %v634
        %v805 = vunpack.c.h.b16 %v634
        %v806 = vunpack.c.l.b16 %v635
        %v807 = vunpack.c.h.b16 %v635
        %v808 = vunpack.c.l.b16 %v636
        %v809 = vunpack.c.h.b16 %v636
        %v810 = vunpack.c.l.b16 %v637
        %v811 = vunpack.c.h.b16 %v637
        %v812 = vunpack.c.l.b16 %v638
        %v813 = vunpack.c.h.b16 %v638
        %v814 = vunpack.c.l.b16 %v639
        %v815 = vunpack.c.h.b16 %v639
        %v816 = vunpack.c.l.b16 %v640
        %v817 = vunpack.c.h.b16 %v640
        %v818 = vunpack.c.l.b16 %v641
        %v819 = vunpack.c.h.b16 %v641
        %v820 = vunpack.c.l.b16 %v642
        %v821 = vunpack.c.h.b16 %v642
        %v822 = vunpack.c.l.b16 %v643
        %v823 = vunpack.c.h.b16 %v643
        %v824 = vunpack.c.l.b16 %v644
        %v825 = vunpack.c.h.b16 %v644
        %v826 = vunpack.c.l.b16 %v645
        %v827 = vunpack.c.h.b16 %v645
        %v828 = vunpack.c.l.b16 %v646
        %v829 = vunpack.c.h.b16 %v646
        %v830 = vunpack.c.l.b16 %v647
        %v831 = vunpack.c.h.b16 %v647
        %v832 = vunpack.c.l.b16 %v648
        %v833 = vunpack.c.h.b16 %v648
        %v834 = vunpack.c.l.b16 %v649
        %v835 = vunpack.c.h.b16 %v649
        %v836 = vunpack.c.l.b16 %v650
        %v837 = vunpack.c.h.b16 %v650
        %v838 = vunpack.c.l.b16 %v651
        %v839 = vunpack.c.h.b16 %v651
        %v840 = vunpack.c.l.b16 %v652
        %v841 = vunpack.c.h.b16 %v652
        %v842 = vunpack.c.l.b16 %v653
        %v843 = vunpack.c.h.b16 %v653
        %v844 = vunpack.c.l.b16 %v654
        %v845 = vunpack.c.h.b16 %v654
        %v846 = vunpack.c.l.b16 %v655
        %v847 = vunpack.c.h.b16 %v655
        %v848 = vunpack.c.l.b16 %v656
        %v849 = vunpack.c.h.b16 %v656
        %v850 = vunpack.c.l.b16 %v657
        %v851 = vunpack.c.h.b16 %v657
        %v852 = vunpack.c.l.b16 %v658
        %v853 = vunpack.c.h.b16 %v658
        %v854 = vunpack.c.l.b16 %v659
        %v855 = vunpack.c.h.b16 %v659
        %v856 = vunpack.c.l.b16 %v660
        %v857 = vunpack.c.h.b16 %v660
        %v858 = vunpack.c.l.b16 %v661
        %v859 = vunpack.c.h.b16 %v661
        %v860 = vunpack.c.l.b16 %v662
        %v861 = vunpack.c.h.b16 %v662
        %v862 = vunpack.c.l.b16 %v663
        %v863 = vunpack.c.h.b16 %v663
        %v864 = vunpack.c.l.b16 %v664
        %v865 = vunpack.c.h.b16 %v664
        %v866 = vunpack.c.l.b16 %v665
        %v867 = vunpack.c.h.b16 %v665
        %v868 = vunpack.c.l.b16 %v666
        %v869 = vunpack.c.h.b16 %v666
        %v870 = vunpack.c.l.b16 %v667
        %v871 = vunpack.c.h.b16 %v667
        %v872 = vunpack.c.l.b16 %v668
        %v873 = vunpack.c.h.b16 %v668
        %v874 = vunpack.c.l.b16 %v669
        %v875 = vunpack.c.h.b16 %v669
        %v876 = vunpack.c.l.b16 %v670
        %v877 = vunpack.c.h.b16 %v670
        %v878 = vunpack.c.l.b16 %v671
        %v879 = vunpack.c.h.b16 %v671
        %v880 = vunpack.c.l.b16 %v672
        %v881 = vunpack.c.h.b16 %v672
        %v882 = vunpack.c.l.b16 %v673
        %v883 = vunpack.c.h.b16 %v673
        %v884 = vunpack.c.l.b16 %v674
        %v885 = vunpack.c.h.b16 %v674
        %v886 = vunpack.c.l.b16 %v675
        %v887 = vunpack.c.h.b16 %v675
        %v888 = vunpack.c.l.b16 %v676
        %v889 = vunpack.c.h.b16 %v676
        %v890 = vunpack.c.l.b16 %v677
        %v891 = vunpack.c.h.b16 %v677
        %v892 = vunpack.c.l.b16 %v678
        %v893 = vunpack.c.h.b16 %v678
        %v894 = vunpack.c.l.b16 %v679
        %v895 = vunpack.c.h.b16 %v679
        %v896 = vunpack.c.l.b16 %v680
        %v897 = vunpack.c.h.b16 %v680
        %v898 = vunpack.c.l.b16 %v681
        %v899 = vunpack.c.h.b16 %v681
        %v900 = vunpack.c.l.b16 %v682
        %v901 = vunpack.c.h.b16 %v682
        %v902 = vunpack.c.l.b16 %v683
        %v903 = vunpack.c.h.b16 %v683
        %v904 = vunpack.c.l.b16 %v684
        %v905 = vunpack.c.h.b16 %v684
        %v906 = vunpack.c.l.b16 %v685
        %v907 = vunpack.c.h.b16 %v685
        %v908 = vunpack.c.l.b16 %v686
        %v909 = vunpack.c.h.b16 %v686
        %v910 = vunpack.c.l.b16 %v687
        %v911 = vunpack.c.h.b16 %v687
        %v912 = vunpack.c.l.b16 %v688
        %v913 = vunpack.c.h.b16 %v688
        %v914 = vunpack.c.l.b16 %v689
        %v915 = vunpack.c.h.b16 %v689
        %v916 = vunpack.c.l.b16 %v690
        %v917 = vunpack.c.h.b16 %v690
        %v918 = vunpack.c.l.b16 %v691
        %v919 = vunpack.c.h.b16 %v691
        %v920 = vunpack.c.l.b16 %v692
        %v921 = vunpack.c.h.b16 %v692
        %v922 = vunpack.c.l.b16 %v693
        %v923 = vunpack.c.h.b16 %v693
        %v924 = vunpack.c.l.b16 %v694
        %v925 = vunpack.c.h.b16 %v694
        %v926 = vunpack.c.l.b16 %v695
        %v927 = vunpack.c.h.b16 %v695
        %v928 = vunpack.c.l.b16 %v696
        %v929 = vunpack.c.h.b16 %v696
        %v930 = vunpack.c.l.b16 %v697
        %v931 = vunpack.c.h.b16 %v697
        %v932 = vpack.c.b16 %v812, %v804
        %v933 = vpack.c.b16 %v813, %v805
        %v934 = vpack.c.b16 %v814, %v806
        %v935 = vpack.c.b16 %v815, %v807
        %v936 = vpack.c.b16 %v816, %v808
        %v937 = vpack.c.b16 %v817, %v809
        %v938 = vpack.c.b16 %v818, %v810
        %v939 = vpack.c.b16 %v819, %v811
        %v940 = vpack.c.b16 %v828, %v820
        %v941 = vpack.c.b16 %v829, %v821
        %v942 = vpack.c.b16 %v830, %v822
        %v943 = vpack.c.b16 %v831, %v823
        %v944 = vpack.c.b16 %v832, %v824
        %v945 = vpack.c.b16 %v833, %v825
        %v946 = vpack.c.b16 %v834, %v826
        %v947 = vpack.c.b16 %v835, %v827
        %v948 = vpack.c.b16 %v844, %v836
        %v949 = vpack.c.b16 %v845, %v837
        %v950 = vpack.c.b16 %v846, %v838
        %v951 = vpack.c.b16 %v847, %v839
        %v952 = vpack.c.b16 %v848, %v840
        %v953 = vpack.c.b16 %v849, %v841
        %v954 = vpack.c.b16 %v850, %v842
        %v955 = vpack.c.b16 %v851, %v843
        %v956 = vpack.c.b16 %v860, %v852
        %v957 = vpack.c.b16 %v861, %v853
        %v958 = vpack.c.b16 %v862, %v854
        %v959 = vpack.c.b16 %v863, %v855
        %v960 = vpack.c.b16 %v864, %v856
        %v961 = vpack.c.b16 %v865, %v857
        %v962 = vpack.c.b16 %v866, %v858
        %v963 = vpack.c.b16 %v867, %v859
        %v964 = vpack.c.b16 %v876, %v868
        %v965 = vpack.c.b16 %v877, %v869
        %v966 = vpack.c.b16 %v878, %v870
        %v967 = vpack.c.b16 %v879, %v871
        %v968 = vpack.c.b16 %v880, %v872
        %v969 = vpack.c.b16 %v881, %v873
        %v970 = vpack.c.b16 %v882, %v874
        %v971 = vpack.c.b16 %v883, %v875
        %v972 = vpack.c.b16 %v892, %v884
        %v973 = vpack.c.b16 %v893, %v885
        %v974 = vpack.c.b16 %v894, %v886
        %v975 = vpack.c.b16 %v895, %v887
        %v976 = vpack.c.b16 %v896, %v888
        %v977 = vpack.c.b16 %v897, %v889
        %v978 = vpack.c.b16 %v898, %v890
        %v979 = vpack.c.b16 %v899, %v891
        %v980 = vpack.c.b16 %v908, %v900
        %v981 = vpack.c.b16 %v909, %v901
        %v982 = vpack.c.b16 %v910, %v902
        %v983 = vpack.c.b16 %v911, %v903
        %v984 = vpack.c.b16 %v912, %v904
        %v985 = vpack.c.b16 %v913, %v905
        %v986 = vpack.c.b16 %v914, %v906
        %v987 = vpack.c.b16 %v915, %v907
        %v988 = vpack.c.b16 %v924, %v916
        %v989 = vpack.c.b16 %v925, %v917
        %v990 = vpack.c.b16 %v926, %v918
        %v991 = vpack.c.b16 %v927, %v919
        %v992 = vpack.c.b16 %v928, %v920
        %v993 = vpack.c.b16 %v929, %v921
        %v994 = vpack.c.b16 %v930, %v922
        %v995 = vpack.c.b16 %v931, %v923
        %1060 = vmatprep.subr.bf16.mxu0 %v933
        %1061 = vmatpush1.bf16.msra.mxu0 %v932
        %1062 = vmatprep.subr.bf16.mxu0 %v941
        %1063 = vmatpush1.bf16.msra.mxu0 %v940
        %1064 = vmatprep.subr.bf16.mxu0 %v949
        %1065 = vmatpush1.bf16.msra.mxu0 %v948
        %1066 = vmatprep.subr.bf16.mxu0 %v957
        %1067 = vmatpush1.bf16.msra.mxu0 %v956
        %1068 = vmatprep.subr.bf16.mxu0 %v965
        %1069 = vmatpush1.bf16.msra.mxu0 %v964
        %1070 = vmatprep.subr.bf16.mxu0 %v973
        %1071 = vmatpush1.bf16.msra.mxu0 %v972
        %1072 = vmatprep.subr.bf16.mxu0 %v981
        %1073 = vmatpush1.bf16.msra.mxu0 %v980
        %1074 = vmatprep.subr.bf16.mxu0 %v989
        %1075 = vmatpush1.bf16.msra.mxu0 %v988
        %1076 = vmatprep.subr.bf16.mxu0 0
        %1077 = vmatpush1.bf16.msra.mxu0 0
        %1078 = vmatprep.subr.bf16.mxu0 0
        %1079 = vmatpush1.bf16.msra.mxu0 0
        %1080 = vmatprep.subr.bf16.mxu0 0
        %1081 = vmatpush1.bf16.msra.mxu0 0
        %1082 = vmatprep.subr.bf16.mxu0 0
        %1083 = vmatpush1.bf16.msra.mxu0 0
        %1084 = vmatprep.subr.bf16.mxu0 0
        %1085 = vmatpush1.bf16.msra.mxu0 0
        %1086 = vmatprep.subr.bf16.mxu0 0
        %1087 = vmatpush1.bf16.msra.mxu0 0
        %1088 = vmatprep.subr.bf16.mxu0 0
        %1089 = vmatpush1.bf16.msra.mxu0 0
        %1090 = vmatprep.subr.bf16.mxu0 0
        %1091 = vmatpush1.bf16.msra.mxu0 0
        %1092 = vmatprep.mubr.bf16.mxu0 0
        %1093 = vmatmul.mubr.bf16.gmra.mrb[0].mxu0 %v633
        %v1094 = vpop.f32.mrb[0].mxu0
        %v1095 = vadd.f32 %v703, %v1094
        %v1096 = vpop.f32.mrb[0].mxu0
        %v1097 = vadd.f32 %v707, %v1096
        %v1098 = vpop.f32.mrb[0].mxu0
        %v1099 = vpop.f32.mrb[0].mxu0
        %1100 = vdwg.mxu0
        %1101 = vmatprep.subr.bf16.mxu0 %v935
        %1102 = vmatpush1.bf16.msra.mxu0 %v934
        %1103 = vmatprep.subr.bf16.mxu0 %v943
        %1104 = vmatpush1.bf16.msra.mxu0 %v942
        %1105 = vmatprep.subr.bf16.mxu0 %v951
        %1106 = vmatpush1.bf16.msra.mxu0 %v950
        %1107 = vmatprep.subr.bf16.mxu0 %v959
        %1108 = vmatpush1.bf16.msra.mxu0 %v958
        %1109 = vmatprep.subr.bf16.mxu0 %v967
        %1110 = vmatpush1.bf16.msra.mxu0 %v966
        %1111 = vmatprep.subr.bf16.mxu0 %v975
        %1112 = vmatpush1.bf16.msra.mxu0 %v974
        %1113 = vmatprep.subr.bf16.mxu0 %v983
        %1114 = vmatpush1.bf16.msra.mxu0 %v982
        %1115 = vmatprep.subr.bf16.mxu0 %v991
        %1116 = vmatpush1.bf16.msra.mxu0 %v990
        %1117 = vmatprep.subr.bf16.mxu0 0
        %1118 = vmatpush1.bf16.msra.mxu0 0
        %1119 = vmatprep.subr.bf16.mxu0 0
        %1120 = vmatpush1.bf16.msra.mxu0 0
        %1121 = vmatprep.subr.bf16.mxu0 0
        %1122 = vmatpush1.bf16.msra.mxu0 0
        %1123 = vmatprep.subr.bf16.mxu0 0
        %1124 = vmatpush1.bf16.msra.mxu0 0
        %1125 = vmatprep.subr.bf16.mxu0 0
        %1126 = vmatpush1.bf16.msra.mxu0 0
        %1127 = vmatprep.subr.bf16.mxu0 0
        %1128 = vmatpush1.bf16.msra.mxu0 0
        %1129 = vmatprep.subr.bf16.mxu0 0
        %1130 = vmatpush1.bf16.msra.mxu0 0
        %1131 = vmatprep.subr.bf16.mxu0 0
        %1132 = vmatpush1.bf16.msra.mxu0 0
        %1133 = vmatprep.mubr.bf16.mxu0 0
        %1134 = vmatmul.mubr.bf16.gmra.mrb[0].mxu0 %v633
        %v1135 = vpop.f32.mrb[0].mxu0
        %v1136 = vadd.f32 %v711, %v1135
        %v1137 = vpop.f32.mrb[0].mxu0
        %v1138 = vadd.f32 %v715, %v1137
        %v1139 = vpop.f32.mrb[0].mxu0
        %v1140 = vpop.f32.mrb[0].mxu0
        %1141 = vdwg.mxu0
        %1142 = vmatprep.subr.bf16.mxu0 %v937
        %1143 = vmatpush1.bf16.msra.mxu0 %v936
        %1144 = vmatprep.subr.bf16.mxu0 %v945
        %1145 = vmatpush1.bf16.msra.mxu0 %v944
        %1146 = vmatprep.subr.bf16.mxu0 %v953
        %1147 = vmatpush1.bf16.msra.mxu0 %v952
        %1148 = vmatprep.subr.bf16.mxu0 %v961
        %1149 = vmatpush1.bf16.msra.mxu0 %v960
        %1150 = vmatprep.subr.bf16.mxu0 %v969
        %1151 = vmatpush1.bf16.msra.mxu0 %v968
        %1152 = vmatprep.subr.bf16.mxu0 %v977
        %1153 = vmatpush1.bf16.msra.mxu0 %v976
        %1154 = vmatprep.subr.bf16.mxu0 %v985
        %1155 = vmatpush1.bf16.msra.mxu0 %v984
        %1156 = vmatprep.subr.bf16.mxu0 %v993
        %1157 = vmatpush1.bf16.msra.mxu0 %v992
        %1158 = vmatprep.subr.bf16.mxu0 0
        %1159 = vmatpush1.bf16.msra.mxu0 0
        %1160 = vmatprep.subr.bf16.mxu0 0
        %1161 = vmatpush1.bf16.msra.mxu0 0
        %1162 = vmatprep.subr.bf16.mxu0 0
        %1163 = vmatpush1.bf16.msra.mxu0 0
        %1164 = vmatprep.subr.bf16.mxu0 0
        %1165 = vmatpush1.bf16.msra.mxu0 0
        %1166 = vmatprep.subr.bf16.mxu0 0
        %1167 = vmatpush1.bf16.msra.mxu0 0
        %1168 = vmatprep.subr.bf16.mxu0 0
        %1169 = vmatpush1.bf16.msra.mxu0 0
        %1170 = vmatprep.subr.bf16.mxu0 0
        %1171 = vmatpush1.bf16.msra.mxu0 0
        %1172 = vmatprep.subr.bf16.mxu0 0
        %1173 = vmatpush1.bf16.msra.mxu0 0
        %1174 = vmatprep.mubr.bf16.mxu0 0
        %1175 = vmatmul.mubr.bf16.gmra.mrb[0].mxu0 %v633
        %v1176 = vpop.f32.mrb[0].mxu0
        %v1177 = vadd.f32 %v719, %v1176
        %v1178 = vpop.f32.mrb[0].mxu0
        %v1179 = vadd.f32 %v723, %v1178
        %v1180 = vpop.f32.mrb[0].mxu0
        %v1181 = vpop.f32.mrb[0].mxu0
        %1182 = vdwg.mxu0
        %1183 = vmatprep.subr.bf16.mxu0 %v939
        %1184 = vmatpush1.bf16.msra.mxu0 %v938
        %1185 = vmatprep.subr.bf16.mxu0 %v947
        %1186 = vmatpush1.bf16.msra.mxu0 %v946
        %1187 = vmatprep.subr.bf16.mxu0 %v955
        %1188 = vmatpush1.bf16.msra.mxu0 %v954
        %1189 = vmatprep.subr.bf16.mxu0 %v963
        %1190 = vmatpush1.bf16.msra.mxu0 %v962
        %1191 = vmatprep.subr.bf16.mxu0 %v971
        %1192 = vmatpush1.bf16.msra.mxu0 %v970
        %1193 = vmatprep.subr.bf16.mxu0 %v979
        %1194 = vmatpush1.bf16.msra.mxu0 %v978
        %1195 = vmatprep.subr.bf16.mxu0 %v987
        %1196 = vmatpush1.bf16.msra.mxu0 %v986
        %1197 = vmatprep.subr.bf16.mxu0 %v995
        %1198 = vmatpush1.bf16.msra.mxu0 %v994
        %1199 = vmatprep.subr.bf16.mxu0 0
        %1200 = vmatpush1.bf16.msra.mxu0 0
        %1201 = vmatprep.subr.bf16.mxu0 0
        %1202 = vmatpush1.bf16.msra.mxu0 0
        %1203 = vmatprep.subr.bf16.mxu0 0
        %1204 = vmatpush1.bf16.msra.mxu0 0
        %1205 = vmatprep.subr.bf16.mxu0 0
        %1206 = vmatpush1.bf16.msra.mxu0 0
        %1207 = vmatprep.subr.bf16.mxu0 0
        %1208 = vmatpush1.bf16.msra.mxu0 0
        %1209 = vmatprep.subr.bf16.mxu0 0
        %1210 = vmatpush1.bf16.msra.mxu0 0
        %1211 = vmatprep.subr.bf16.mxu0 0
        %1212 = vmatpush1.bf16.msra.mxu0 0
        %1213 = vmatprep.subr.bf16.mxu0 0
        %1214 = vmatpush1.bf16.msra.mxu0 0
        %1215 = vmatprep.mubr.bf16.mxu0 0
        %1216 = vmatmul.mubr.bf16.gmra.mrb[0].mxu0 %v633
        %v1217 = vpop.f32.mrb[0].mxu0
        %v1218 = vadd.f32 %v727, %v1217
        %v1219 = vpop.f32.mrb[0].mxu0
        %v1220 = vadd.f32 %v731, %v1219
        %v1221 = vpop.f32.mrb[0].mxu0
        %v1222 = vpop.f32.mrb[0].mxu0
        %1223 = vdwg.mxu0
        %1224 = vst [vmem:[%s353] sm:$0xff] %v1095
        %1225 = vst [vmem:[%s353 + $0x8] sm:$0xff] %v1097
        %1226 = vst [vmem:[%s353 + $0x10] sm:$0xff] %v1136
        %1227 = vst [vmem:[%s353 + $0x18] sm:$0xff] %v1138
        %1228 = vst [vmem:[%s353 + $0x20] sm:$0xff] %v1177
        %1229 = vst [vmem:[%s353 + $0x28] sm:$0xff] %v1179
        %1230 = vst [vmem:[%s353 + $0x30] sm:$0xff] %v1218
        %1231 = vst [vmem:[%s353 + $0x38] sm:$0xff] %v1220
        %s1232 = sand.u32 %s227, 1
        %s1233 = scalar_lea.sflag [#allocation4], %s1232
        %s1234 = sand.u32 %s227, 1
        %s1235 = smul.addr %s1234, 64
        %s1236 = scalar_lea.vmem [#allocation7], %s1235
        // Predicated region
        $region65: #{tpu_custom_call.1} parent=55 // pred_check
          %p1237 = pneg %p237
        $region66: #{tpu_custom_call.1} parent=55 // pred_check_branch
          %1239 = sbr.rel (%p1237) target = $region68
        $region67: #{tpu_custom_call.1} parent=55 // pred_region
          %s1241 = ssub.s32 1024, 1024
          %1242 = vsyncadd %s1233, %s1241
          %s1243 = smul.addr %s25, 8
          %s1244 = smul.addr %s1243, 128
          %s1245 = scalar_lea.hbm %s9, %s1244
          %s1247 = sshll.u32 %s1236, 4
          %s1248 = int_to_ptr.vmem [resolvable:$true] %s1247
          %1250 = dma.vmem_to_hbm [thread:$0]  %s1248, 1024, %s1245, %s1233
        $region68: #{tpu_custom_call.1} parent=55 // pred_fallthru
          _
      $region56: #{tpu_custom_call.1} parent=5 // pred_fallthru
        _
      %p1251 = scmp.le.s32.totalorder 2, %s20
      // Predicated region
      $region69: #{tpu_custom_call.1} parent=5 // pred_check
        %p1252 = pneg %p1251
      $region70: #{tpu_custom_call.1} parent=5 // pred_check_branch
        %1254 = sbr.rel (%p1252) target = $region72
      $region71: #{tpu_custom_call.1} parent=5 // pred_region
        %s1255 = ssub.s32 %s20, 2
        // Predicated region
        $region73: #{tpu_custom_call.1} parent=71 // pred_check
          %p1256 = pneg %p243
        $region74: #{tpu_custom_call.1} parent=71 // pred_check_branch
          %1258 = sbr.rel (%p1256) target = $region76
        $region75: #{tpu_custom_call.1} parent=71 // pred_region
          %s1259 = sand.u32 %s228, 1
          %s1260 = scalar_lea.sflag [#allocation4], %s1259
          %s1261 = sand.u32 %s228, 1
          %s1262 = smul.addr %s1261, 64
          %s1263 = scalar_lea.vmem [#allocation7], %s1262
          %1264 = dma.done %s1260, 1024
        $region76: #{tpu_custom_call.1} parent=71 // pred_fallthru
          _
      $region72: #{tpu_custom_call.1} parent=5 // pred_fallthru
        _
    $region6: #{tpu_custom_call.1} parent=1 // loop_footer
      %s24 = sadd.s32 1, %s20
    $region7: #{tpu_custom_call.1} parent=1 // loop_footer_branch
      %19 = sbr.rel target = $region3
    $region8: #{tpu_custom_call.1} parent=1 // loop_exit
      _
    %1265 = vsyncpa [#allocation3], 1
    %s1266 = scalar_lea.sflag [#allocation3], 1
    %1267 = vsyncpa %s1266, 1
    %1268 = vsyncpa [#allocation6], 1
    %1269 = vsyncpa [#allocation4], 1
    %s1270 = scalar_lea.sflag [#allocation4], 1
    %1271 = vsyncpa %s1270, 1

</llo_original>
